<compile_context>
chip_gen: v7x
topology: tpu7x:2x2x1
jax: 0.10.0
libtpu: 0.0.40
codegen_flags: <defaults>
</compile_context>

<pallas_src>
import functools

import jax
import jax.numpy as jnp
from jax import lax
from jax.experimental import pallas as pl
from jax.experimental.pallas import tpu as pltpu


def _round_up(v, m):
    return (v + m - 1) // m * m


def _adjusted_motif_kernel(xa_ref, xb_ref, w_ref, mot_ref, pre_ref, *,
                           K, TL, M, BN, threshold, nlm_out):
    """One (batch block, sequence tile) per grid step.

    xa_ref : (BN*4, TL)   f32  main x tile (channels folded into the sublane axis)
    xb_ref : (BN*4, 128)  f32  first 128 columns of the next tile (conv halo)
    w_ref  : (2M, 4K+1)   f32  fused im2col weights [w1 || w2] + bias column
    mot_ref, pre_ref           (BN, TL, M) if nlm_out else (BN, M, TL)
    """
    w = w_ref[...]                                  # hoisted out of the row loop
    ones_row = jnp.ones((1, TL), jnp.float32)       # bias "tap" (hoisted)

    def per_row(n, carry):
        r0 = pl.multiple_of(4 * n, 4)
        xa = xa_ref[pl.ds(r0, 4), :]                              # (4, TL)
        if K > 1:
            halo = xb_ref[pl.ds(r0, 4), pl.ds(0, K - 1)]          # (4, K-1)
            win = jnp.concatenate([xa, halo], axis=1)             # (4, TL+K-1)
        else:
            win = xa

        # Register im2col (no VMEM scratch round-trip) + ones row for the bias;
        # ONE fused MXU matmul covers both motif models.
        xu = jnp.concatenate([win[:, k:k + TL] for k in range(K)] + [ones_row],
                             axis=0)                              # (4K+1, TL)
        y = jnp.dot(w, xu, preferred_element_type=jnp.float32)    # (2M, TL)

        adj = y[:M, :]        # model_to_adjust (pre-sparsity)
        adt = y[M:, :]        # adjustment_model
        if threshold >= 0.0:
            # adj > threshold >= 0  <=>  sparsified value != 0, so one predicate
            # drives both the sparsity zeroing and the adjustment mask.
            keep = adj > threshold
            pre = jnp.where(keep, adj, 0.0)
            mot = jnp.where(keep, adj + adt, 0.0)
        else:
            # Exact reference semantics for negative thresholds.
            pre = jnp.where(adj > threshold, adj, 0.0)
            mot = pre + jnp.where(pre != 0.0, adt, 0.0)

        if nlm_out:
            # (N, L, M) outputs straight from the kernel (no wrapper transpose);
            # transpose + store in 128-row chunks to bound live vregs.
            for c in range(TL // 128):
                cs = pl.ds(c * 128, 128)
                mot_ref[n, cs, :] = jnp.transpose(
                    mot[:, c * 128:(c + 1) * 128]).astype(mot_ref.dtype)
                pre_ref[n, cs, :] = jnp.transpose(
                    pre[:, c * 128:(c + 1) * 128]).astype(pre_ref.dtype)
        else:
            # Packed channels-first layout: lane-dense, unmasked stores.
            mot_ref[n] = mot.astype(mot_ref.dtype)
            pre_ref[n] = pre.astype(pre_ref.dtype)
        return carry

    lax.fori_loop(0, BN, per_row, 0)


def _vmem_need_bytes(BN, TL, M, K, out_itemsize, nlm_out):
    """Padded, double-buffered VMEM footprint of all pipelined blocks."""
    x_rows = _round_up(BN * 4, 8)
    need = 2 * x_rows * TL * 4                                          # xa block
    need += 2 * x_rows * 128 * 4                                        # halo block
    need += 2 * _round_up(2 * M, 8) * _round_up(4 * K + 1, 128) * 4     # fused weights
    if nlm_out:
        # (BN, TL, M) blocks lane-pad M -> 128 in VMEM.
        need += 2 * 2 * BN * TL * 128 * out_itemsize
    else:
        sub = max(8, 32 // out_itemsize)
        need += 2 * 2 * BN * _round_up(M, sub) * TL * out_itemsize
    return need


def _batch_block_candidates(N, max_bn):
    # BN*4 must be divisible by 8 (sublane tile) or equal the full first dim (BN==N).
    cands = [b for b in range(1, N + 1)
             if N % b == 0 and b <= max_bn and (b % 2 == 0 or b == N)]
    return sorted(cands) if cands else [N]


def _pick_tiles(N, Lr, M, K, out_itemsize, nlm_out, seq_tile, batch_block,
                max_tl=512, max_bn=8, budget=28 << 20):
    tl_cands = [t for t in range(128, Lr + 1, 128) if Lr % t == 0]
    bn_cands = _batch_block_candidates(N, max_bn)

    if seq_tile is not None:
        TL = int(seq_tile)
        assert TL % 128 == 0 and Lr % TL == 0, "seq_tile must be a 128-multiple dividing L"
    else:
        TL = max([t for t in tl_cands if t <= max_tl] or [tl_cands[0]])

    if batch_block is not None:
        BN = int(batch_block)
        assert N % BN == 0 and (BN % 2 == 0 or BN == N), \
            "batch_block must divide N and be even (or equal N)"
    else:
        BN = bn_cands[0]
        for b in bn_cands:
            if _vmem_need_bytes(b, TL, M, K, out_itemsize, nlm_out) <= budget:
                BN = b

    # v7x has 2 TensorCores per chip: make sure the grid has >= 2 steps.
    while (N // BN) * (Lr // TL) < 2:
        if TL >= 256 and (TL // 2) % 128 == 0 and Lr % (TL // 2) == 0:
            TL //= 2
        elif any(b < BN for b in bn_cands):
            BN = max(b for b in bn_cands if b < BN)
        else:
            break
    return TL, BN


def adjusted_motif_model(x, w1, b1, w2, b2, *, threshold=0.0, seq_tile=None,
                         batch_block=None, out_dtype=jnp.float32,
                         packed_ncl_output=False, vmem_budget_bytes=28 << 20):
    """AdjustedMotifModel forward pass.

    x        : (N, L, 4)  nucleotide sequence, channels last
    w1, b1   : (K, 4, M), (M,)  model_to_adjust conv parameters
    w2, b2   : (K, 4, M), (M,)  adjustment_model conv parameters
    threshold: sparsity-enforcer threshold (values <= threshold are zeroed)

    Returns dict(motifs, pre_adjustment_motifs):
      (N, L, M) by default, or (N, M, L) lane-dense when packed_ncl_output=True.
    """
    N, L, C = x.shape
    K, Cw, M = w1.shape
    assert C == 4 and Cw == 4 and w2.shape == (K, 4, M)
    assert b1.shape == (M,) and b2.shape == (M,)
    pad_left = (K - 1) // 2
    # TODO(synk): even-K 'same' padding convention unverified vs PyTorch (odd K typical).

    Lr = _round_up(max(L, 128), 128)      # lane-aligned working length
    out_itemsize = jnp.dtype(out_dtype).itemsize
    nlm_out = not packed_ncl_output

    TL, BN = _pick_tiles(N, Lr, M, K, out_itemsize, nlm_out, seq_tile, batch_block,
                         budget=vmem_budget_bytes)
    NBT, NLT = N // BN, Lr // TL
    LX = Lr + TL            # right extension so the halo block (l+1) always exists

    # x -> (N*4, LX) f32: channels folded into the sublane axis (avoids the 4->8/16
    # sublane-padding blow-up of an (N, 4, L) layout); 'same' zero padding included.
    x_rows = jnp.transpose(x, (0, 2, 1)).reshape(N * 4, L).astype(jnp.float32)
    x_packed = jnp.pad(x_rows, ((0, 0), (pad_left, LX - L - pad_left)))

    # Fuse both motif models and fold the biases in as an extra contraction row.
    w_fused = jnp.concatenate([w1, w2], axis=-1).reshape(K * 4, 2 * M)      # (4K, 2M)
    b_fused = jnp.concatenate([b1, b2]).reshape(1, 2 * M)
    w_aug = jnp.concatenate([w_fused, b_fused], axis=0).T.astype(jnp.float32)  # (2M, 4K+1)

    kernel = functools.partial(_adjusted_motif_kernel, K=K, TL=TL, M=M, BN=BN,
                               threshold=float(threshold), nlm_out=nlm_out)

    need = _vmem_need_bytes(BN, TL, M, K, out_itemsize, nlm_out)
    vmem_limit = int(min(max(need * 3 // 2 + (4 << 20), 16 << 20), 100 << 20))

    if nlm_out:
        out_shape = (jax.ShapeDtypeStruct((N, Lr, M), out_dtype),
                     jax.ShapeDtypeStruct((N, Lr, M), out_dtype))
        out_specs = [pl.BlockSpec((BN, TL, M), lambda nb, l: (nb, l, 0)),
                     pl.BlockSpec((BN, TL, M), lambda nb, l: (nb, l, 0))]
    else:
        out_shape = (jax.ShapeDtypeStruct((N, M, Lr), out_dtype),
                     jax.ShapeDtypeStruct((N, M, Lr), out_dtype))
        out_specs = [pl.BlockSpec((BN, M, TL), lambda nb, l: (nb, 0, l)),
                     pl.BlockSpec((BN, M, TL), lambda nb, l: (nb, 0, l))]

    halo_blocks = TL // 128
    motifs, pre = pl.pallas_call(
        kernel,
        out_shape=out_shape,
        grid_spec=pltpu.PrefetchScalarGridSpec(
            num_scalar_prefetch=0,
            grid=(NBT, NLT),
            in_specs=[
                pl.BlockSpec((BN * 4, TL), lambda nb, l: (nb, l)),
                pl.BlockSpec((BN * 4, 128),
                             lambda nb, l: (nb, (l + 1) * halo_blocks)),
                pl.BlockSpec((2 * M, 4 * K + 1), lambda nb, l: (0, 0)),
            ],
            out_specs=out_specs,
        ),
        compiler_params=pltpu.CompilerParams(
            dimension_semantics=("parallel", "parallel"),
            vmem_limit_bytes=vmem_limit),
    )(x_packed, x_packed, w_aug)

    if Lr != L:
        # TODO(synk): the non-multiple-of-128 L fallback slices (copies) the outputs.
        if nlm_out:
            motifs, pre = motifs[:, :L, :], pre[:, :L, :]
        else:
            motifs, pre = motifs[:, :, :L], pre[:, :, :L]
    return dict(motifs=motifs, pre_adjustment_motifs=pre)


def _reference(x, w1, b1, w2, b2, threshold=0.0):
    """Pure-JAX reference of the same forward pass (channels-last, f32)."""
    N, L, _ = x.shape
    K, _, M = w1.shape
    pad = (K - 1) // 2
    x_pad = jnp.pad(x, ((0, 0), (pad, K - 1 - pad), (0, 0)))

    def conv(w, b):
        acc = jnp.zeros((N, L, M), jnp.float32)
        for k in range(K):
            acc = acc + jnp.einsum('nlc,cm->nlm', x_pad[:, k:k + L, :], w[k])
        return acc + b

    to_adjust = conv(w1, b1)
    to_adjust = jnp.where(to_adjust > threshold, to_adjust, 0.0)
    adjustment = conv(w2, b2) * (to_adjust != 0.0).astype(jnp.float32)
    return dict(motifs=to_adjust + adjustment, pre_adjustment_motifs=to_adjust)


if __name__ == "__main__":
    key = jax.random.PRNGKey(0)
    k_x, k_w1, k_b1, k_w2, k_b2 = jax.random.split(key, 5)

    N, L, C_IN, K, NUM_MOTIFS = 2, 256, 4, 9, 8

    # One-hot nucleotide input, channels-last (N, L, 4).
    idx = jax.random.randint(k_x, (N, L), 0, C_IN)
    x = jax.nn.one_hot(idx, C_IN, dtype=jnp.float32)

    # Deterministic synthetic parameters (no checkpoint loading).
    w1 = jax.random.normal(k_w1, (K, C_IN, NUM_MOTIFS), jnp.float32) * 0.3
    b1 = jax.random.normal(k_b1, (NUM_MOTIFS,), jnp.float32) * 0.1
    w2 = jax.random.normal(k_w2, (K, C_IN, NUM_MOTIFS), jnp.float32) * 0.3
    b2 = jax.random.normal(k_b2, (NUM_MOTIFS,), jnp.float32) * 0.1

    # Default (N, L, M) path: auto tiling, explicit tiling, and the exact (<0) epilogue.
    for thr, tile in ((0.0, None), (0.0, 128), (-0.3, 128)):
        out = adjusted_motif_model(x, w1, b1, w2, b2, threshold=thr, seq_tile=tile)
        jax.block_until_ready(out)
        ref = _reference(x, w1, b1, w2, b2, threshold=thr)
        for name in ("motifs", "pre_adjustment_motifs"):
            assert out[name].shape == (N, L, NUM_MOTIFS)
            assert jnp.allclose(out[name], ref[name], atol=2e-5, rtol=1e-5), (thr, tile, name)

    # L not a multiple of 128 exercises the pad-and-slice fallback.
    x192 = x[:, :192, :]
    out = adjusted_motif_model(x192, w1, b1, w2, b2, threshold=0.0)
    jax.block_until_ready(out)
    ref = _reference(x192, w1, b1, w2, b2, threshold=0.0)
    for name in ("motifs", "pre_adjustment_motifs"):
        assert out[name].shape == (N, 192, NUM_MOTIFS)
        assert jnp.allclose(out[name], ref[name], atol=2e-5, rtol=1e-5), ("L192", name)

    # Packed channels-first path (lane-dense stores) for NCL-tolerant consumers.
    out_p = adjusted_motif_model(x, w1, b1, w2, b2, threshold=0.0, packed_ncl_output=True)
    jax.block_until_ready(out_p)
    ref = _reference(x, w1, b1, w2, b2, threshold=0.0)
    for name in ("motifs", "pre_adjustment_motifs"):
        assert out_p[name].shape == (N, NUM_MOTIFS, L)
        assert jnp.allclose(out_p[name], jnp.transpose(ref[name], (0, 2, 1)),
                            atol=2e-5, rtol=1e-5), ("packed", name)

    print("KERNEL_OK")
</pallas_src>

<mosaic_0001>
module attributes {stable_mosaic.version = 11 : i64} {
  func.func @_adjusted_motif_kernel(%arg0: i32, %arg1: i32, %arg2: memref<8x128xf32, #tpu.memory_space<vmem>>, %arg3: memref<8x128xf32, #tpu.memory_space<vmem>>, %arg4: memref<16x37xf32, #tpu.memory_space<vmem>>, %arg5: memref<2x128x8xf32, #tpu.memory_space<vmem>>, %arg6: memref<2x128x8xf32, #tpu.memory_space<vmem>>) attributes {dimension_semantics = [#tpu.dimension_semantics<parallel>, #tpu.dimension_semantics<parallel>], iteration_bounds = array<i64: 1, 2>, scalar_prefetch = 0 : i64, scratch_operands = 0 : i64, tpu.core_type = #tpu.core_type<tc>, window_params = [{transform_indices = @transform_0, window_bounds = array<i64: 8, 128>}, {transform_indices = @transform_1, window_bounds = array<i64: 8, 128>}, {pipeline_mode = #tpu.pipeline_mode<synchronous>, transform_indices = @transform_2, window_bounds = array<i64: 16, 37>}, {transform_indices = @transform_3, window_bounds = array<i64: 2, 128, 8>}, {transform_indices = @transform_4, window_bounds = array<i64: 2, 128, 8>}]} {
    %c0 = arith.constant 0 : index
    %c0_0 = arith.constant 0 : index
    %0 = vector.load %arg4[%c0, %c0_0] : memref<16x37xf32, #tpu.memory_space<vmem>>, vector<16x37xf32>
    %cst = arith.constant 1.000000e+00 : f32
    %1 = vector.broadcast %cst : f32 to vector<1x128xf32>
    %c0_i32 = arith.constant 0 : i32
    %c2_i32 = arith.constant 2 : i32
    %2 = arith.addi %c0_i32, %c2_i32 : i32
    %c1_i32 = arith.constant 1 : i32
    scf.for %arg7 = %c0_i32 to %2 step %c1_i32  : i32 {
      %c4_i32 = arith.constant 4 : i32
      %3 = arith.muli %c4_i32, %arg7 : i32
      %4 = tpu.assume_multiple %3, 4 : i32
      %5 = arith.index_cast %4 : i32 to index
      %c0_2 = arith.constant 0 : index
      %6 = vector.load %arg2[%5, %c0_2] : memref<8x128xf32, #tpu.memory_space<vmem>>, vector<4x128xf32>
      %7 = arith.index_cast %4 : i32 to index
      %c0_3 = arith.constant 0 : index
      %8 = vector.load %arg3[%7, %c0_3] : memref<8x128xf32, #tpu.memory_space<vmem>>, vector<4x8xf32>
      %9 = tpu.concatenate %6, %8 in 1 : vector<4x128xf32>, vector<4x8xf32> -> vector<4x136xf32>
      %10 = vector.extract_strided_slice %9 {offsets = [0, 0], sizes = [4, 128], strides = [1, 1]} : vector<4x136xf32> to vector<4x128xf32>
      %11 = vector.extract_strided_slice %9 {offsets = [0, 1], sizes = [4, 128], strides = [1, 1]} : vector<4x136xf32> to vector<4x128xf32>
      %12 = vector.extract_strided_slice %9 {offsets = [0, 2], sizes = [4, 128], strides = [1, 1]} : vector<4x136xf32> to vector<4x128xf32>
      %13 = vector.extract_strided_slice %9 {offsets = [0, 3], sizes = [4, 128], strides = [1, 1]} : vector<4x136xf32> to vector<4x128xf32>
      %14 = vector.extract_strided_slice %9 {offsets = [0, 4], sizes = [4, 128], strides = [1, 1]} : vector<4x136xf32> to vector<4x128xf32>
      %15 = vector.extract_strided_slice %9 {offsets = [0, 5], sizes = [4, 128], strides = [1, 1]} : vector<4x136xf32> to vector<4x128xf32>
      %16 = vector.extract_strided_slice %9 {offsets = [0, 6], sizes = [4, 128], strides = [1, 1]} : vector<4x136xf32> to vector<4x128xf32>
      %17 = vector.extract_strided_slice %9 {offsets = [0, 7], sizes = [4, 128], strides = [1, 1]} : vector<4x136xf32> to vector<4x128xf32>
      %18 = vector.extract_strided_slice %9 {offsets = [0, 8], sizes = [4, 128], strides = [1, 1]} : vector<4x136xf32> to vector<4x128xf32>
      %19 = tpu.concatenate %10, %11, %12, %13, %14, %15, %16, %17, %18, %1 in 0 : vector<4x128xf32>, vector<4x128xf32>, vector<4x128xf32>, vector<4x128xf32>, vector<4x128xf32>, vector<4x128xf32>, vector<4x128xf32>, vector<4x128xf32>, vector<4x128xf32>, vector<1x128xf32> -> vector<37x128xf32>
      %cst_4 = arith.constant dense<0.000000e+00> : vector<16x128xf32>
      %20 = tpu.matmul %0, %19, %cst_4 {dimension_numbers = #tpu.dot_dimension_numbers<[1], [0], [0], [1], [0, 0, 1, 1], [], []>} : vector<16x37xf32>, vector<37x128xf32>, vector<16x128xf32> -> vector<16x128xf32>
      %21 = vector.extract_strided_slice %20 {offsets = [0, 0], sizes = [8, 128], strides = [1, 1]} : vector<16x128xf32> to vector<8x128xf32>
      %22 = vector.extract_strided_slice %20 {offsets = [8, 0], sizes = [8, 128], strides = [1, 1]} : vector<16x128xf32> to vector<8x128xf32>
      %cst_5 = arith.constant 0.000000e+00 : f32
      %23 = vector.broadcast %cst_5 : f32 to vector<8x128xf32>
      %24 = arith.cmpf ogt, %21, %23 : vector<8x128xf32>
      %cst_6 = arith.constant 0.000000e+00 : f32
      %25 = vector.broadcast %cst_6 : f32 to vector<8x128xf32>
      %26 = arith.select %24, %21, %25 : vector<8x128xi1>, vector<8x128xf32>
      %27 = arith.addf %21, %22 : vector<8x128xf32>
      %cst_7 = arith.constant 0.000000e+00 : f32
      %28 = vector.broadcast %cst_7 : f32 to vector<8x128xf32>
      %29 = arith.select %24, %27, %28 : vector<8x128xi1>, vector<8x128xf32>
      %30 = tpu.transpose %29, [1, 0] : vector<8x128xf32> -> vector<128x8xf32>
      %31 = arith.index_cast %arg7 : i32 to index
      %c0_8 = arith.constant 0 : index
      %c0_9 = arith.constant 0 : index
      %32 = vector.load %arg5[%31, %c0_8, %c0_9] : memref<2x128x8xf32, #tpu.memory_space<vmem>>, vector<1x128x8xf32>
      %33 = vector.shape_cast %32 : vector<1x128x8xf32> to vector<128x8xf32>
      %34 = vector.shape_cast %30 : vector<128x8xf32> to vector<1x128x8xf32>
      tpu.vector_store %arg5[%31, %c0_8, %c0_9], %34 {strides = array<i32>} : memref<2x128x8xf32, #tpu.memory_space<vmem>>, vector<1x128x8xf32>,
      %35 = tpu.transpose %26, [1, 0] : vector<8x128xf32> -> vector<128x8xf32>
      %36 = arith.index_cast %arg7 : i32 to index
      %c0_10 = arith.constant 0 : index
      %c0_11 = arith.constant 0 : index
      %37 = vector.load %arg6[%36, %c0_10, %c0_11] : memref<2x128x8xf32, #tpu.memory_space<vmem>>, vector<1x128x8xf32>
      %38 = vector.shape_cast %37 : vector<1x128x8xf32> to vector<128x8xf32>
      %39 = vector.shape_cast %35 : vector<128x8xf32> to vector<1x128x8xf32>
      tpu.vector_store %arg6[%36, %c0_10, %c0_11], %39 {strides = array<i32>} : memref<2x128x8xf32, #tpu.memory_space<vmem>>, vector<1x128x8xf32>,
    }
    %c2_i32_1 = arith.constant 2 : i32
    return
  }
  func.func @transform_0(%arg0: i32, %arg1: i32) -> (i32, i32) {
    %c0_i32 = arith.constant 0 : i32
    return %arg0, %arg1 : i32, i32
  }
  func.func @transform_1(%arg0: i32, %arg1: i32) -> (i32, i32) {
    %c1_i32 = arith.constant 1 : i32
    %0 = arith.addi %arg1, %c1_i32 : i32
    %c1_i32_0 = arith.constant 1 : i32
    %1 = arith.muli %0, %c1_i32_0 : i32
    %c0_i32 = arith.constant 0 : i32
    return %arg0, %1 : i32, i32
  }
  func.func @transform_2(%arg0: i32, %arg1: i32) -> (i32, i32) {
    %c0_i32 = arith.constant 0 : i32
    %c0_i32_0 = arith.constant 0 : i32
    %c0_i32_1 = arith.constant 0 : i32
    return %c0_i32, %c0_i32_0 : i32, i32
  }
  func.func @transform_3(%arg0: i32, %arg1: i32) -> (i32, i32, i32) {
    %c0_i32 = arith.constant 0 : i32
    %c0_i32_0 = arith.constant 0 : i32
    return %arg0, %arg1, %c0_i32 : i32, i32, i32
  }
  func.func @transform_4(%arg0: i32, %arg1: i32) -> (i32, i32, i32) {
    %c0_i32 = arith.constant 0 : i32
    %c0_i32_0 = arith.constant 0 : i32
    return %arg0, %arg1, %c0_i32 : i32, i32, i32
  }
}

</mosaic_0001>

<llo_original>
// kernel: tpu_custom_call.1
$region0: #{tpu_custom_call.1}
  #allocation0 [shape = 'u32[]', space=smem, size = 0x4, offset = 0x4, fixed_abs, tag = 'smem constant byte address 0x4 - core index']
  #allocation1 [shape = 'u32[144,128]{1,0:T(1,128)}', space=vmem, size = 0x12000, scoped, tag = 'internal scratch']
  %s0 = inlined_call_operand.hbm [shape: f32[8,384], index: 0, kind: input, shape index: {}]
  %s1 = inlined_call_operand.hbm [shape: f32[8,384], index: 1, kind: input, shape index: {}]
  %s2 = inlined_call_operand.hbm [shape: f32[16,37], index: 2, kind: input, shape index: {}]
  %s3 = inlined_call_operand.vmem [shape: f32[2,256,8], index: 3, kind: output, shape index: {0}]
  %s4 = inlined_call_operand.vmem [shape: f32[2,256,8], index: 4, kind: output, shape index: {1}]
  %5 = xla_tuple %s3, %s4
  %s6 = sld [smem:[#allocation0]]
  $region140: #{tpu_custom_call.1} parent=0
    _
  %s8 = ssub.s32 1, %s6
  %s9 = scalar_select 0, %s8, %s6
  $region1: #{tpu_custom_call.1} parent=0
    #allocation2 [shape = 'u8[8192]{0}', space=vmem, size = 0x2000, scoped, tag = 'input window, operand 0']
    #allocation3 [shape = 's32[2]{0}', space=sflag, size = 0x8, scoped, tag = 'scoped memory for tpu_custom_call.1']
    #allocation4 [shape = 'u8[8192]{0}', space=vmem, size = 0x2000, scoped, tag = 'input window, operand 1']
    #allocation5 [shape = 's32[2]{0}', space=sflag, size = 0x8, scoped, tag = 'scoped memory for tpu_custom_call.1']
    #allocation6 [shape = 'u8[8192]{0}', space=vmem, size = 0x2000, scoped, tag = 'input window, operand 2, single buffered']
    #allocation7 [shape = 'u8[262144]{0}', space=vmem, size = 0x40000, scoped, tag = 'output window, operand 0']
    #allocation8 [shape = 'u8[262144]{0}', space=vmem, size = 0x40000, scoped, tag = 'output window, operand 1']
    %10 = vsyncpa [#allocation3], 0
    %s11 = scalar_lea.sflag [#allocation3], 1
    %12 = vsyncpa %s11, 0
    %13 = vsyncpa [#allocation5], 0
    %s14 = scalar_lea.sflag [#allocation5], 1
    %15 = vsyncpa %s14, 0
    loop: start=0, step=1, limit=4
    $region2: #{tpu_custom_call.1} parent=1 // loop_pre_header
      _
    $region3: #{tpu_custom_call.1} parent=1 // loop_header
      %s17 = sphi 0, %s21
      %p18 = scmp.ge.s32.totalorder %s17, 4
      %s24 = sphi 0, %s36
      %s25 = sphi 0, %s32
      %s26 = sphi 0, %s24
      %s27 = sphi 0, %s25
      %s28 = sphi 0, %s26
      %s29 = sphi 0, %s27
      %s41 = sphi 0, %s43
      %s44 = sphi 0, %s41
      %s45 = sphi 0, %s44
      %s61 = sphi 0, %s45
      %s71 = sphi 0, %s73
      %s74 = sphi 0, %s71
      %s75 = sphi 0, %s74
      %s91 = sphi 0, %s75
      %s95 = sphi 0, %s95
      %s97 = sphi 0, %s95
      %s98 = sphi 0, %s97
      %s112 = sphi 0, %s98
      %s120 = sphi 0, %s122
      %s123 = sphi 0, %s120
      %s124 = sphi 0, %s123
      %s140 = sphi 0, %s124
      %s148 = sphi 0, %s150
      %s151 = sphi 0, %s148
      %s152 = sphi 0, %s151
      %s168 = sphi 0, %s152
    $region4: #{tpu_custom_call.1} parent=1 // loop_header_branch
      %20 = sbr.rel (%p18) target = $region8
    $region5: #{tpu_custom_call.1} parent=1 // loop_body
      %s22 = ssub.s32 %s17, 1
      %s23 = ssub.s32 %s17, 2
      %s30 = sadd.s32 1, %s25
      %p31 = scmp.ge.s32.totalorder %s30, 2
      %s32 = scalar_select %p31, 0, %s30
      %s33 = sadd.s32 1, %s24
      %s34 = scalar_select %p31, %s33, %s24
      %p35 = scmp.ge.s32.totalorder %s34, 1
      %s36 = scalar_select %p35, 0, %s34
      %s37 = ssub.s32 %s24, %s36
      %s38 = ssub.s32 %s25, %s32
      %s39 = sor.u32 %s37, %s38
      %p40 = scmp.eq.s32.totalorder %s39, 0
      %s42 = sadd.s32 %s41, 1
      %s43 = scalar_select %p40, %s41, %s42
      %p46 = pneg %p40
      %p47 = scmp.eq.s32.totalorder %s17, 1
      %p48 = por %p46, %p47
      %p49 = scmp.ne.s32.totalorder %s41, %s44
      %p50 = scmp.eq.s32.totalorder %s17, 0
      %p51 = por %p49, %p50
      %p52 = scmp.ne.s32.totalorder %s41, %s44
      %p53 = scmp.eq.s32.totalorder %s22, 1
      %p54 = por %p52, %p53
      %p55 = scmp.ne.s32.totalorder %s44, %s45
      %p56 = scmp.eq.s32.totalorder %s22, 0
      %p57 = por %p55, %p56
      %p58 = scmp.ne.s32.totalorder %s44, %s45
      %p59 = scmp.eq.s32.totalorder %s23, 1
      %p60 = por %p58, %p59
      %p62 = scmp.ne.s32.totalorder %s45, %s61
      %p63 = scmp.eq.s32.totalorder %s23, 0
      %p64 = por %p62, %p63
      %s65 = sadd.s32 %s25, 1
      %s66 = sadd.s32 %s32, 1
      %s67 = ssub.s32 %s24, %s36
      %s68 = ssub.s32 %s65, %s66
      %s69 = sor.u32 %s67, %s68
      %p70 = scmp.eq.s32.totalorder %s69, 0
      %s72 = sadd.s32 %s71, 1
      %s73 = scalar_select %p70, %s71, %s72
      %p76 = pneg %p70
      %p77 = scmp.eq.s32.totalorder %s17, 1
      %p78 = por %p76, %p77
      %p79 = scmp.ne.s32.totalorder %s71, %s74
      %p80 = scmp.eq.s32.totalorder %s17, 0
      %p81 = por %p79, %p80
      %p82 = scmp.ne.s32.totalorder %s71, %s74
      %p83 = scmp.eq.s32.totalorder %s22, 1
      %p84 = por %p82, %p83
      %p85 = scmp.ne.s32.totalorder %s74, %s75
      %p86 = scmp.eq.s32.totalorder %s22, 0
      %p87 = por %p85, %p86
      %p88 = scmp.ne.s32.totalorder %s74, %s75
      %p89 = scmp.eq.s32.totalorder %s23, 1
      %p90 = por %p88, %p89
      %p92 = scmp.ne.s32.totalorder %s75, %s91
      %p93 = scmp.eq.s32.totalorder %s23, 0
      %p94 = por %p92, %p93
      %s96 = sadd.s32 %s95, 1
      %p99 = scmp.eq.s32.totalorder %s17, 1
      %p100 = scmp.ne.s32.totalorder %s95, %s97
      %p101 = scmp.eq.s32.totalorder %s17, 0
      %p102 = por %p100, %p101
      %p103 = scmp.ne.s32.totalorder %s95, %s97
      %p104 = scmp.eq.s32.totalorder %s22, 1
      %p105 = por %p103, %p104
      %p106 = scmp.ne.s32.totalorder %s97, %s98
      %p107 = scmp.eq.s32.totalorder %s22, 0
      %p108 = por %p106, %p107
      %p109 = scmp.ne.s32.totalorder %s97, %s98
      %p110 = scmp.eq.s32.totalorder %s23, 1
      %p111 = por %p109, %p110
      %p113 = scmp.ne.s32.totalorder %s98, %s112
      %p114 = scmp.eq.s32.totalorder %s23, 0
      %p115 = por %p113, %p114
      %s116 = ssub.s32 %s24, %s36
      %s117 = ssub.s32 %s25, %s32
      %s118 = sor.u32 %s116, %s117
      %p119 = scmp.eq.s32.totalorder %s118, 0
      %s121 = sadd.s32 %s120, 1
      %s122 = scalar_select %p119, %s120, %s121
      %p125 = pneg %p119
      %p126 = scmp.eq.s32.totalorder %s17, 1
      %p127 = por %p125, %p126
      %p128 = scmp.ne.s32.totalorder %s120, %s123
      %p129 = scmp.eq.s32.totalorder %s17, 0
      %p130 = por %p128, %p129
      %p131 = scmp.ne.s32.totalorder %s120, %s123
      %p132 = scmp.eq.s32.totalorder %s22, 1
      %p133 = por %p131, %p132
      %p134 = scmp.ne.s32.totalorder %s123, %s124
      %p135 = scmp.eq.s32.totalorder %s22, 0
      %p136 = por %p134, %p135
      %p137 = scmp.ne.s32.totalorder %s123, %s124
      %p138 = scmp.eq.s32.totalorder %s23, 1
      %p139 = por %p137, %p138
      %p141 = scmp.ne.s32.totalorder %s124, %s140
      %p142 = scmp.eq.s32.totalorder %s23, 0
      %p143 = por %p141, %p142
      %s144 = ssub.s32 %s24, %s36
      %s145 = ssub.s32 %s25, %s32
      %s146 = sor.u32 %s144, %s145
      %p147 = scmp.eq.s32.totalorder %s146, 0
      %s149 = sadd.s32 %s148, 1
      %s150 = scalar_select %p147, %s148, %s149
      %p153 = pneg %p147
      %p154 = scmp.eq.s32.totalorder %s17, 1
      %p155 = por %p153, %p154
      %p156 = scmp.ne.s32.totalorder %s148, %s151
      %p157 = scmp.eq.s32.totalorder %s17, 0
      %p158 = por %p156, %p157
      %p159 = scmp.ne.s32.totalorder %s148, %s151
      %p160 = scmp.eq.s32.totalorder %s22, 1
      %p161 = por %p159, %p160
      %p162 = scmp.ne.s32.totalorder %s151, %s152
      %p163 = scmp.eq.s32.totalorder %s22, 0
      %p164 = por %p162, %p163
      %p165 = scmp.ne.s32.totalorder %s151, %s152
      %p166 = scmp.eq.s32.totalorder %s23, 1
      %p167 = por %p165, %p166
      %p169 = scmp.ne.s32.totalorder %s152, %s168
      %p170 = scmp.eq.s32.totalorder %s23, 0
      %p171 = por %p169, %p170
      %p172 = scmp.le.s32.totalorder 1, %s17
      %p173 = scmp.lt.s32.totalorder %s17, 3
      %p174 = pnand %p172, %p173
      %p175 = pneg %p174
      // Predicated region
      $region9: #{tpu_custom_call.1} parent=5 // pred_check
        _
      $region10: #{tpu_custom_call.1} parent=5 // pred_check_branch
        %177 = sbr.rel (%p174) target = $region12
      $region11: #{tpu_custom_call.1} parent=5 // pred_region
        %s178 = ssub.s32 %s17, 1
        // Predicated region
        $region13: #{tpu_custom_call.1} parent=11 // pred_check
          %p179 = pneg %p108
        $region14: #{tpu_custom_call.1} parent=11 // pred_check_branch
          %181 = sbr.rel (%p179) target = $region16
        $region15: #{tpu_custom_call.1} parent=11 // pred_region
          %s183 = ssub.s32 256, 256
          %184 = vsyncadd [#allocation5], %s183
          %s185 = sshll.u32 [#allocation6], 4
          %s186 = int_to_ptr.vmem [resolvable:$true] %s185
          %191 = dma.hbm_to_vmem [thread:$0]  %s2, 256, %s186, [#allocation5], 128, 128, 8
        $region16: #{tpu_custom_call.1} parent=11 // pred_fallthru
          _
      $region12: #{tpu_custom_call.1} parent=5 // pred_fallthru
        _
      %p192 = scmp.lt.s32.totalorder %s17, 2
      // Predicated region
      $region17: #{tpu_custom_call.1} parent=5 // pred_check
        %p193 = pneg %p192
      $region18: #{tpu_custom_call.1} parent=5 // pred_check_branch
        %195 = sbr.rel (%p193) target = $region20
      $region19: #{tpu_custom_call.1} parent=5 // pred_region
        // Predicated region
        $region21: #{tpu_custom_call.1} parent=19 // pred_check
          %p196 = pneg %p51
        $region22: #{tpu_custom_call.1} parent=19 // pred_check_branch
          %198 = sbr.rel (%p196) target = $region24
        $region23: #{tpu_custom_call.1} parent=19 // pred_region
          %s199 = sand.u32 %s41, 1
          %s200 = scalar_lea.sflag [#allocation3], %s199
          %s201 = sand.u32 %s41, 1
          %s202 = smul.addr %s201, 8
          %s203 = scalar_lea.vmem [#allocation2], %s202
          %s205 = ssub.s32 128, 128
          %206 = vsyncadd %s200, %s205
          %s207 = smul.addr %s24, 3
          %s208 = sadd.s32 %s25, %s207
          %s209 = smul.addr %s208, 128
          %s210 = scalar_lea.hbm %s0, %s209
          %s212 = sshll.u32 %s203, 4
          %s213 = int_to_ptr.vmem [resolvable:$true] %s212
          %215 = dma.hbm_to_vmem [thread:$0]  %s210, 128, %s213, %s200
        $region24: #{tpu_custom_call.1} parent=19 // pred_fallthru
          _
        // Predicated region
        $region25: #{tpu_custom_call.1} parent=19 // pred_check
          %p216 = pneg %p81
        $region26: #{tpu_custom_call.1} parent=19 // pred_check_branch
          %218 = sbr.rel (%p216) target = $region28
        $region27: #{tpu_custom_call.1} parent=19 // pred_region
          %s219 = sand.u32 %s17, 1
          %s220 = scalar_lea.sflag [#allocation5], %s219
          %s221 = sand.u32 %s71, 1
          %s222 = smul.addr %s221, 8
          %s223 = scalar_lea.vmem [#allocation4], %s222
          %s224 = sadd.s32 %s25, 1
          %s226 = ssub.s32 128, 128
          %227 = vsyncadd %s220, %s226
          %s228 = smul.addr %s24, 3
          %s229 = sadd.s32 %s224, %s228
          %s230 = smul.addr %s229, 128
          %s231 = scalar_lea.hbm %s1, %s230
          %s233 = sshll.u32 %s223, 4
          %s234 = int_to_ptr.vmem [resolvable:$true] %s233
          %236 = dma.hbm_to_vmem [thread:$0]  %s231, 128, %s234, %s220
        $region28: #{tpu_custom_call.1} parent=19 // pred_fallthru
          _
      $region20: #{tpu_custom_call.1} parent=5 // pred_fallthru
        _
      %p237 = scmp.le.s32.totalorder 1, %s17
      %p238 = scmp.lt.s32.totalorder %s17, 3
      %p239 = pnand %p237, %p238
      %p240 = pneg %p239
      // Predicated region
      $region29: #{tpu_custom_call.1} parent=5 // pred_check
        _
      $region30: #{tpu_custom_call.1} parent=5 // pred_check_branch
        %242 = sbr.rel (%p239) target = $region32
      $region31: #{tpu_custom_call.1} parent=5 // pred_region
        %s243 = ssub.s32 %s17, 1
        %s244 = sand.u32 %s44, 1
        %s245 = scalar_lea.sflag [#allocation3], %s244
        %s246 = sand.u32 %s44, 1
        %s247 = smul.addr %s246, 8
        %s248 = scalar_lea.vmem [#allocation2], %s247
        // Predicated region
        $region33: #{tpu_custom_call.1} parent=31 // pred_check
          %p249 = pneg %p57
        $region34: #{tpu_custom_call.1} parent=31 // pred_check_branch
          %251 = sbr.rel (%p249) target = $region36
        $region35: #{tpu_custom_call.1} parent=31 // pred_region
          %252 = dma.done %s245, 128
        $region36: #{tpu_custom_call.1} parent=31 // pred_fallthru
          _
        %s253 = sand.u32 %s22, 1
        %s254 = scalar_lea.sflag [#allocation5], %s253
        %s255 = sand.u32 %s74, 1
        %s256 = smul.addr %s255, 8
        %s257 = scalar_lea.vmem [#allocation4], %s256
        // Predicated region
        $region37: #{tpu_custom_call.1} parent=31 // pred_check
          %p258 = pneg %p87
        $region38: #{tpu_custom_call.1} parent=31 // pred_check_branch
          %260 = sbr.rel (%p258) target = $region40
        $region39: #{tpu_custom_call.1} parent=31 // pred_region
          %261 = dma.done %s254, 128
        $region40: #{tpu_custom_call.1} parent=31 // pred_fallthru
          _
        // Predicated region
        $region41: #{tpu_custom_call.1} parent=31 // pred_check
          %p262 = pneg %p108
        $region42: #{tpu_custom_call.1} parent=31 // pred_check_branch
          %264 = sbr.rel (%p262) target = $region44
        $region43: #{tpu_custom_call.1} parent=31 // pred_region
          %265 = dma.done [#allocation5], 256
        $region44: #{tpu_custom_call.1} parent=31 // pred_fallthru
          _
        %s266 = sand.u32 %s44, 1
        %s267 = scalar_lea.sflag [#allocation3], %s266
        %s268 = sand.u32 %s44, 1
        %s269 = smul.addr %s268, 8
        %s270 = scalar_lea.vmem [#allocation2], %s269
        %p271 = pneg %p57
        %p272 = pneg %p54
        %s273 = sand.u32 %s22, 1
        %s274 = scalar_lea.sflag [#allocation5], %s273
        %s275 = sand.u32 %s74, 1
        %s276 = smul.addr %s275, 8
        %s277 = scalar_lea.vmem [#allocation4], %s276
        %p278 = pneg %p87
        %p279 = pneg %p84
        %p280 = pneg %p108
        %p281 = pneg %p105
        %p282 = pneg %p136
        %p283 = pneg %p133
        %s284 = sand.u32 %s123, 1
        %s285 = sand.u32 %s123, 1
        %s286 = smul.addr %s285, 256
        %s287 = scalar_lea.vmem [#allocation7], %s286
        %p288 = pneg %p164
        %p289 = pneg %p161
        %s290 = sand.u32 %s151, 1
        %s291 = sand.u32 %s151, 1
        %s292 = smul.addr %s291, 256
        %s293 = scalar_lea.vmem [#allocation8], %s292
        %s294 = sadd.s32 %s27, 1
        %s295 = smul.u32 2, %s26
        %s296 = smul.u32 16, %s27
        %s297 = smul.u32 2, %s26
        %s298 = smul.u32 16, %s27
        %v299 = vld [vmem:[#allocation6] sm:$0xff]
        %v300 = vld [vmem:[#allocation6 + $0x8] sm:$0xff]
        loop: start=0, step=1, limit=2
        $region45: #{tpu_custom_call.1} parent=31 // loop_pre_header
          _
        $region46: #{tpu_custom_call.1} parent=31 // loop_header
          %s302 = sphi 0, %s306
          %p303 = scmp.ge.s32.totalorder %s302, 2
        $region47: #{tpu_custom_call.1} parent=31 // loop_header_branch
          %305 = sbr.rel (%p303) target = $region51
        $region48: #{tpu_custom_call.1} parent=31 // loop_body
          %s307 = smul.u32 %s302, 4
          %s308 = scalar_lea.vmem %s248, %s307 [#allocation2]
          %v309 = vld [vmem:[%s308] sm:$0xf]
          %s310 = scalar_lea.vmem %s257, %s307 [#allocation4]
          %v311 = vld [vmem:[%s310] sm:$0xf]
          %v314 = vrot.slane %v309, 4
          %v315 = vrot.slane %v311, 4
          %316 = vrot.lane.b32.xlu0 %v314, 127
          %v317 = vpop.permute.xlu0 %316
          %318 = vrot.lane.b32.xlu0 %v315, 127
          %v319 = vpop.permute.xlu0 %318
          %vm320 = vcmask 1039360
          %v321 = vsel %vm320, %v317, %v319
          %323 = vrot.lane.b32.xlu0 %v309, 126
          %v324 = vpop.permute.xlu0 %323
          %325 = vrot.lane.b32.xlu0 %v311, 126
          %v326 = vpop.permute.xlu0 %325
          %vm327 = vcmask 1031168
          %v328 = vsel %vm327, %v324, %v326
          %330 = vrot.lane.b32.xlu0 %v314, 125
          %v331 = vpop.permute.xlu0 %330
          %332 = vrot.lane.b32.xlu0 %v315, 125
          %v333 = vpop.permute.xlu0 %332
          %vm334 = vcmask 1022976
          %v335 = vsel %vm334, %v331, %v333
          %337 = vrot.lane.b32.xlu0 %v309, 124
          %v338 = vpop.permute.xlu0 %337
          %339 = vrot.lane.b32.xlu0 %v311, 124
          %v340 = vpop.permute.xlu0 %339
          %vm341 = vcmask 1014784
          %v342 = vsel %vm341, %v338, %v340
          %344 = vrot.lane.b32.xlu0 %v314, 123
          %v345 = vpop.permute.xlu0 %344
          %346 = vrot.lane.b32.xlu0 %v315, 123
          %v347 = vpop.permute.xlu0 %346
          %vm348 = vcmask 1006592
          %v349 = vsel %vm348, %v345, %v347
          %351 = vrot.lane.b32.xlu0 %v309, 122
          %v352 = vpop.permute.xlu0 %351
          %353 = vrot.lane.b32.xlu0 %v311, 122
          %v354 = vpop.permute.xlu0 %353
          %vm355 = vcmask 998400
          %v356 = vsel %vm355, %v352, %v354
          %358 = vrot.lane.b32.xlu0 %v314, 121
          %v359 = vpop.permute.xlu0 %358
          %360 = vrot.lane.b32.xlu0 %v315, 121
          %v361 = vpop.permute.xlu0 %360
          %vm362 = vcmask 990208
          %v363 = vsel %vm362, %v359, %v361
          %365 = vrot.lane.b32.xlu0 %v309, 120
          %v366 = vpop.permute.xlu0 %365
          %367 = vrot.lane.b32.xlu0 %v311, 120
          %v368 = vpop.permute.xlu0 %367
          %vm369 = vcmask 982016
          %v370 = vsel %vm369, %v366, %v368
          %vm372 = vcmask 1043456
          %v373 = vsel %vm372, %v309, %v321
          %v374 = vsel %vm372, %v328, %v335
          %v375 = vsel %vm372, %v342, %v349
          %v376 = vsel %vm372, %v356, %v363
          %v377 = vsel %vm372, %v370, 1.0
          %vm378 = vcmask 302080
          %v380 = vsel %vm378, %v299, 0
          %v383 = vsel %vm378, %v300, 0
          %vm385 = vcmask 1044480
          %v387 = vsel %vm385, %v377, 0
          %389 = vmatprep.subr.mxu0 0.0
          %390 = vmatpush1.msra.mxu0 %v373
          %391 = vmatprep.subr.mxu0 0.0
          %392 = vmatpush1.msra.mxu0 %v374
          %393 = vmatprep.subr.mxu0 0.0
          %394 = vmatpush1.msra.mxu0 %v375
          %395 = vmatprep.subr.mxu0 0.0
          %396 = vmatpush1.msra.mxu0 %v376
          %397 = vmatprep.subr.mxu0 0.0
          %398 = vmatpush1.msra.mxu0 %v387
          %399 = vmatprep.subr.mxu0 0.0
          %400 = vmatpush1.msra.mxu0 0.0
          %401 = vmatprep.subr.mxu0 0.0
          %402 = vmatpush1.msra.mxu0 0.0
          %403 = vmatprep.subr.mxu0 0.0
          %404 = vmatpush1.msra.mxu0 0.0
          %405 = vmatprep.subr.mxu0 0.0
          %406 = vmatpush1.msra.mxu0 0.0
          %407 = vmatprep.subr.mxu0 0.0
          %408 = vmatpush1.msra.mxu0 0.0
          %409 = vmatprep.subr.mxu0 0.0
          %410 = vmatpush1.msra.mxu0 0.0
          %411 = vmatprep.subr.mxu0 0.0
          %412 = vmatpush1.msra.mxu0 0.0
          %413 = vmatprep.subr.mxu0 0.0
          %414 = vmatpush1.msra.mxu0 0.0
          %415 = vmatprep.subr.mxu0 0.0
          %416 = vmatpush1.msra.mxu0 0.0
          %417 = vmatprep.subr.mxu0 0.0
          %418 = vmatpush1.msra.mxu0 0.0
          %419 = vmatprep.subr.mxu0 0.0
          %420 = vmatpush1.msra.mxu0 0.0
          %421 = vmatprep.subr.mxu0 0.0
          %422 = vmatpush1.msra.mxu0 0.0
          %423 = vmatprep.subr.mxu0 0.0
          %424 = vmatpush1.msra.mxu0 0.0
          %425 = vmatprep.subr.mxu0 0.0
          %426 = vmatpush1.msra.mxu0 0.0
          %427 = vmatprep.subr.mxu0 0.0
          %428 = vmatpush1.msra.mxu0 0.0
          %429 = vmatprep.subr.mxu0 0.0
          %430 = vmatpush1.msra.mxu0 0.0
          %431 = vmatprep.subr.mxu0 0.0
          %432 = vmatpush1.msra.mxu0 0.0
          %433 = vmatprep.subr.mxu0 0.0
          %434 = vmatpush1.msra.mxu0 0.0
          %435 = vmatprep.subr.mxu0 0.0
          %436 = vmatpush1.msra.mxu0 0.0
          %437 = vmatprep.subr.mxu0 0.0
          %438 = vmatpush1.msra.mxu0 0.0
          %439 = vmatprep.subr.mxu0 0.0
          %440 = vmatpush1.msra.mxu0 0.0
          %441 = vmatprep.subr.mxu0 0.0
          %442 = vmatpush1.msra.mxu0 0.0
          %443 = vmatprep.subr.mxu0 0.0
          %444 = vmatpush1.msra.mxu0 0.0
          %445 = vmatprep.subr.mxu0 0.0
          %446 = vmatpush1.msra.mxu0 0.0
          %447 = vmatprep.subr.mxu0 0.0
          %448 = vmatpush1.msra.mxu0 0.0
          %449 = vmatprep.subr.mxu0 0.0
          %450 = vmatpush1.msra.mxu0 0.0
          %451 = vmatprep.subr.mxu0 0.0
          %452 = vmatpush1.msra.mxu0 0.0
          %453 = vmatprep.mubr.f32.mxu0 0.0
          %454 = vmatmul.mubr.f32.gmra.mrb[0].mxu0 %v380
          %v455 = vpop.f32.mrb[0].mxu0
          %v456 = vadd.f32 0.0, %v455
          %v457 = vpop.f32.mrb[0].mxu0
          %458 = vmatprep.mubr.f32.mxu0 0.0
          %459 = vmatmul.mubr.f32.gmra.mrb[0].mxu0 %v383
          %v460 = vpop.f32.mrb[0].mxu0
          %v461 = vadd.f32 0.0, %v460
          %v462 = vpop.f32.mrb[0].mxu0
          %463 = vdwg.mxu0
          %vm464 = vcmp.gt.f32.partialorder %v456, 0.0
          %v465 = vsel %vm464, %v456, 0.0
          %v466 = vadd.f32 %v456, %v461
          %v467 = vsel %vm464, %v466, 0.0
          %468 = vxpose.xlu0.b32.start [1/16] %v467, 128
          %469 = vxpose.xlu0.b32.cont [2/16] 0.0, 128
          %470 = vxpose.xlu0.b32.cont [3/16] 0.0, 128
          %471 = vxpose.xlu0.b32.cont [4/16] 0.0, 128
          %472 = vxpose.xlu0.b32.cont [5/16] 0.0, 128
          %473 = vxpose.xlu0.b32.cont [6/16] 0.0, 128
          %474 = vxpose.xlu0.b32.cont [7/16] 0.0, 128
          %475 = vxpose.xlu0.b32.cont [8/16] 0.0, 128
          %476 = vxpose.xlu0.b32.cont [9/16] 0.0, 128
          %477 = vxpose.xlu0.b32.cont [10/16] 0.0, 128
          %478 = vxpose.xlu0.b32.cont [11/16] 0.0, 128
          %479 = vxpose.xlu0.b32.cont [12/16] 0.0, 128
          %480 = vxpose.xlu0.b32.cont [13/16] 0.0, 128
          %481 = vxpose.xlu0.b32.cont [14/16] 0.0, 128
          %482 = vxpose.xlu0.b32.cont [15/16] 0.0, 128
          %483 = vxpose.xlu0.b32.end [16/16] 0.0, 128
          %v484 = vpop.trf.xlu0
          %v485 = vpop.trf.xlu0
          %v486 = vpop.trf.xlu0
          %v487 = vpop.trf.xlu0
          %v488 = vpop.trf.xlu0
          %v489 = vpop.trf.xlu0
          %v490 = vpop.trf.xlu0
          %v491 = vpop.trf.xlu0
          %v492 = vpop.trf.xlu0
          %v493 = vpop.trf.xlu0
          %v494 = vpop.trf.xlu0
          %v495 = vpop.trf.xlu0
          %v496 = vpop.trf.xlu0
          %v497 = vpop.trf.xlu0
          %v498 = vpop.trf.xlu0
          %v499 = vpop.trf.xlu0
          %s500 = smul.u32 %s302, 128
          %s501 = scalar_lea.vmem %s287, %s500 [#allocation7]
          %vm502 = vcmask 64512
          %503 = vst.msk [vmem:[%s501] sm:$0xff] %vm502, %v484
          %504 = vst.msk [vmem:[%s501 + $0x8] sm:$0xff] %vm502, %v485
          %505 = vst.msk [vmem:[%s501 + $0x10] sm:$0xff] %vm502, %v486
          %506 = vst.msk [vmem:[%s501 + $0x18] sm:$0xff] %vm502, %v487
          %507 = vst.msk [vmem:[%s501 + $0x20] sm:$0xff] %vm502, %v488
          %508 = vst.msk [vmem:[%s501 + $0x28] sm:$0xff] %vm502, %v489
          %509 = vst.msk [vmem:[%s501 + $0x30] sm:$0xff] %vm502, %v490
          %510 = vst.msk [vmem:[%s501 + $0x38] sm:$0xff] %vm502, %v491
          %511 = vst.msk [vmem:[%s501 + $0x40] sm:$0xff] %vm502, %v492
          %512 = vst.msk [vmem:[%s501 + $0x48] sm:$0xff] %vm502, %v493
          %513 = vst.msk [vmem:[%s501 + $0x50] sm:$0xff] %vm502, %v494
          %514 = vst.msk [vmem:[%s501 + $0x58] sm:$0xff] %vm502, %v495
          %515 = vst.msk [vmem:[%s501 + $0x60] sm:$0xff] %vm502, %v496
          %516 = vst.msk [vmem:[%s501 + $0x68] sm:$0xff] %vm502, %v497
          %517 = vst.msk [vmem:[%s501 + $0x70] sm:$0xff] %vm502, %v498
          %518 = vst.msk [vmem:[%s501 + $0x78] sm:$0xff] %vm502, %v499
          %519 = vxpose.xlu0.b32.start [1/16] %v465, 128
          %520 = vxpose.xlu0.b32.cont [2/16] 0.0, 128
          %521 = vxpose.xlu0.b32.cont [3/16] 0.0, 128
          %522 = vxpose.xlu0.b32.cont [4/16] 0.0, 128
          %523 = vxpose.xlu0.b32.cont [5/16] 0.0, 128
          %524 = vxpose.xlu0.b32.cont [6/16] 0.0, 128
          %525 = vxpose.xlu0.b32.cont [7/16] 0.0, 128
          %526 = vxpose.xlu0.b32.cont [8/16] 0.0, 128
          %527 = vxpose.xlu0.b32.cont [9/16] 0.0, 128
          %528 = vxpose.xlu0.b32.cont [10/16] 0.0, 128
          %529 = vxpose.xlu0.b32.cont [11/16] 0.0, 128
          %530 = vxpose.xlu0.b32.cont [12/16] 0.0, 128
          %531 = vxpose.xlu0.b32.cont [13/16] 0.0, 128
          %532 = vxpose.xlu0.b32.cont [14/16] 0.0, 128
          %533 = vxpose.xlu0.b32.cont [15/16] 0.0, 128
          %534 = vxpose.xlu0.b32.end [16/16] 0.0, 128
          %v535 = vpop.trf.xlu0
          %v536 = vpop.trf.xlu0
          %v537 = vpop.trf.xlu0
          %v538 = vpop.trf.xlu0
          %v539 = vpop.trf.xlu0
          %v540 = vpop.trf.xlu0
          %v541 = vpop.trf.xlu0
          %v542 = vpop.trf.xlu0
          %v543 = vpop.trf.xlu0
          %v544 = vpop.trf.xlu0
          %v545 = vpop.trf.xlu0
          %v546 = vpop.trf.xlu0
          %v547 = vpop.trf.xlu0
          %v548 = vpop.trf.xlu0
          %v549 = vpop.trf.xlu0
          %v550 = vpop.trf.xlu0
          %s551 = scalar_lea.vmem %s293, %s500 [#allocation8]
          %552 = vst.msk [vmem:[%s551] sm:$0xff] %vm502, %v535
          %553 = vst.msk [vmem:[%s551 + $0x8] sm:$0xff] %vm502, %v536
          %554 = vst.msk [vmem:[%s551 + $0x10] sm:$0xff] %vm502, %v537
          %555 = vst.msk [vmem:[%s551 + $0x18] sm:$0xff] %vm502, %v538
          %556 = vst.msk [vmem:[%s551 + $0x20] sm:$0xff] %vm502, %v539
          %557 = vst.msk [vmem:[%s551 + $0x28] sm:$0xff] %vm502, %v540
          %558 = vst.msk [vmem:[%s551 + $0x30] sm:$0xff] %vm502, %v541
          %559 = vst.msk [vmem:[%s551 + $0x38] sm:$0xff] %vm502, %v542
          %560 = vst.msk [vmem:[%s551 + $0x40] sm:$0xff] %vm502, %v543
          %561 = vst.msk [vmem:[%s551 + $0x48] sm:$0xff] %vm502, %v544
          %562 = vst.msk [vmem:[%s551 + $0x50] sm:$0xff] %vm502, %v545
          %563 = vst.msk [vmem:[%s551 + $0x58] sm:$0xff] %vm502, %v546
          %564 = vst.msk [vmem:[%s551 + $0x60] sm:$0xff] %vm502, %v547
          %565 = vst.msk [vmem:[%s551 + $0x68] sm:$0xff] %vm502, %v548
          %566 = vst.msk [vmem:[%s551 + $0x70] sm:$0xff] %vm502, %v549
          %567 = vst.msk [vmem:[%s551 + $0x78] sm:$0xff] %vm502, %v550
        $region49: #{tpu_custom_call.1} parent=31 // loop_footer
          %s306 = sadd.s32 1, %s302
        $region50: #{tpu_custom_call.1} parent=31 // loop_footer_branch
          %301 = sbr.rel target = $region46
        $region51: #{tpu_custom_call.1} parent=31 // loop_exit
          _
        %s568 = sand.u32 %s123, 1
        %s569 = sand.u32 %s123, 1
        %s570 = smul.addr %s569, 256
        %s571 = scalar_lea.vmem [#allocation7], %s570
        %s572 = sand.u32 %s151, 1
        %s573 = sand.u32 %s151, 1
        %s574 = smul.addr %s573, 256
        %s575 = scalar_lea.vmem [#allocation8], %s574
        // Predicated region
        $region52: #{tpu_custom_call.1} parent=31 // pred_check
          %p576 = pneg %p133
        $region53: #{tpu_custom_call.1} parent=31 // pred_check_branch
          %578 = sbr.rel (%p576) target = $region55
        $region54: #{tpu_custom_call.1} parent=31 // pred_region
          %s579 = smul.u32 2, %s26
          %s580 = smul.u32 16, %s27
          %s581 = smul.addr %s579, 32
          %s582 = sadd.s32 %s580, %s581
          %s583 = smul.addr %s582, 8
          %s584 = scalar_lea.vmem %s3, %s583
          // Predicated region
          $region56: #{tpu_custom_call.1} parent=54 // pred_check
            _
          $region57: #{tpu_custom_call.1} parent=54 // pred_check_branch
            %586 = sbr.rel (0) target = $region59
          $region58: #{tpu_custom_call.1} parent=54 // pred_region
            // Predicated region
            $region60: #{tpu_custom_call.1} parent=58 // pred_check
              _
            $region61: #{tpu_custom_call.1} parent=58 // pred_check_branch
              %588 = sbr.rel (0) target = $region63
            $region62: #{tpu_custom_call.1} parent=58 // pred_region
              // Predicated region
              $region75: #{tpu_custom_call.1} parent=62 // pred_check
                _
              $region76: #{tpu_custom_call.1} parent=62 // pred_check_branch
                %665 = sbr.rel (0) target = $region78
              $region77: #{tpu_custom_call.1} parent=62 // pred_region
                loop: start=0, step=1, limit=1
                $region79: #{tpu_custom_call.1} parent=77 // loop_pre_header
                  _
                $region80: #{tpu_custom_call.1} parent=77 // loop_header
                  %s667 = sphi 0, %s671
                  %p668 = scmp.ge.s32.totalorder %s667, 1
                  %s672 = sphi %s571, %s571
                  %s673 = sphi %s584, %s584
                $region81: #{tpu_custom_call.1} parent=77 // loop_header_branch
                  %670 = sbr.rel (%p668) target = $region85
                $region82: #{tpu_custom_call.1} parent=77 // loop_body
                  %v674 = vld [vmem:[%s672] sm:$0xff]
                  %675 = vst [vmem:[%s673] sm:$0xff] %v674
                  %v676 = vld [vmem:[%s672 + $0x8] sm:$0xff]
                  %677 = vst [vmem:[%s673 + $0x8] sm:$0xff] %v676
                  %v678 = vld [vmem:[%s672 + $0x10] sm:$0xff]
                  %679 = vst [vmem:[%s673 + $0x10] sm:$0xff] %v678
                  %v680 = vld [vmem:[%s672 + $0x18] sm:$0xff]
                  %681 = vst [vmem:[%s673 + $0x18] sm:$0xff] %v680
                  %v682 = vld [vmem:[%s672 + $0x20] sm:$0xff]
                  %683 = vst [vmem:[%s673 + $0x20] sm:$0xff] %v682
                  %v684 = vld [vmem:[%s672 + $0x28] sm:$0xff]
                  %685 = vst [vmem:[%s673 + $0x28] sm:$0xff] %v684
                  %v686 = vld [vmem:[%s672 + $0x30] sm:$0xff]
                  %687 = vst [vmem:[%s673 + $0x30] sm:$0xff] %v686
                  %v688 = vld [vmem:[%s672 + $0x38] sm:$0xff]
                  %689 = vst [vmem:[%s673 + $0x38] sm:$0xff] %v688
                  %v690 = vld [vmem:[%s672 + $0x40] sm:$0xff]
                  %691 = vst [vmem:[%s673 + $0x40] sm:$0xff] %v690
                  %v692 = vld [vmem:[%s672 + $0x48] sm:$0xff]
                  %693 = vst [vmem:[%s673 + $0x48] sm:$0xff] %v692
                  %v694 = vld [vmem:[%s672 + $0x50] sm:$0xff]
                  %695 = vst [vmem:[%s673 + $0x50] sm:$0xff] %v694
                  %v696 = vld [vmem:[%s672 + $0x58] sm:$0xff]
                  %697 = vst [vmem:[%s673 + $0x58] sm:$0xff] %v696
                  %v698 = vld [vmem:[%s672 + $0x60] sm:$0xff]
                  %699 = vst [vmem:[%s673 + $0x60] sm:$0xff] %v698
                  %v700 = vld [vmem:[%s672 + $0x68] sm:$0xff]
                  %701 = vst [vmem:[%s673 + $0x68] sm:$0xff] %v700
                  %v702 = vld [vmem:[%s672 + $0x70] sm:$0xff]
                  %703 = vst [vmem:[%s673 + $0x70] sm:$0xff] %v702
                  %v704 = vld [vmem:[%s672 + $0x78] sm:$0xff]
                  %705 = vst [vmem:[%s673 + $0x78] sm:$0xff] %v704
                  %v706 = vld [vmem:[%s672 + $0x80] sm:$0xff]
                  %707 = vst [vmem:[%s673 + $0x100] sm:$0xff] %v706
                  %v708 = vld [vmem:[%s672 + $0x88] sm:$0xff]
                  %709 = vst [vmem:[%s673 + $0x108] sm:$0xff] %v708
                  %v710 = vld [vmem:[%s672 + $0x90] sm:$0xff]
                  %711 = vst [vmem:[%s673 + $0x110] sm:$0xff] %v710
                  %v712 = vld [vmem:[%s672 + $0x98] sm:$0xff]
                  %713 = vst [vmem:[%s673 + $0x118] sm:$0xff] %v712
                  %v714 = vld [vmem:[%s672 + $0xa0] sm:$0xff]
                  %715 = vst [vmem:[%s673 + $0x120] sm:$0xff] %v714
                  %v716 = vld [vmem:[%s672 + $0xa8] sm:$0xff]
                  %717 = vst [vmem:[%s673 + $0x128] sm:$0xff] %v716
                  %v718 = vld [vmem:[%s672 + $0xb0] sm:$0xff]
                  %719 = vst [vmem:[%s673 + $0x130] sm:$0xff] %v718
                  %v720 = vld [vmem:[%s672 + $0xb8] sm:$0xff]
                  %721 = vst [vmem:[%s673 + $0x138] sm:$0xff] %v720
                  %v722 = vld [vmem:[%s672 + $0xc0] sm:$0xff]
                  %723 = vst [vmem:[%s673 + $0x140] sm:$0xff] %v722
                  %v724 = vld [vmem:[%s672 + $0xc8] sm:$0xff]
                  %725 = vst [vmem:[%s673 + $0x148] sm:$0xff] %v724
                  %v726 = vld [vmem:[%s672 + $0xd0] sm:$0xff]
                  %727 = vst [vmem:[%s673 + $0x150] sm:$0xff] %v726
                  %v728 = vld [vmem:[%s672 + $0xd8] sm:$0xff]
                  %729 = vst [vmem:[%s673 + $0x158] sm:$0xff] %v728
                  %v730 = vld [vmem:[%s672 + $0xe0] sm:$0xff]
                  %731 = vst [vmem:[%s673 + $0x160] sm:$0xff] %v730
                  %v732 = vld [vmem:[%s672 + $0xe8] sm:$0xff]
                  %733 = vst [vmem:[%s673 + $0x168] sm:$0xff] %v732
                  %v734 = vld [vmem:[%s672 + $0xf0] sm:$0xff]
                  %735 = vst [vmem:[%s673 + $0x170] sm:$0xff] %v734
                  %v736 = vld [vmem:[%s672 + $0xf8] sm:$0xff]
                  %737 = vst [vmem:[%s673 + $0x178] sm:$0xff] %v736
                $region83: #{tpu_custom_call.1} parent=77 // loop_footer
                  %s671 = sadd.s32 1, %s667
                $region84: #{tpu_custom_call.1} parent=77 // loop_footer_branch
                  %666 = sbr.rel target = $region80
                $region85: #{tpu_custom_call.1} parent=77 // loop_exit
                  _
              $region78: #{tpu_custom_call.1} parent=62 // pred_fallthru
                _
              // Predicated region
              $region86: #{tpu_custom_call.1} parent=62 // pred_check
                _
              $region87: #{tpu_custom_call.1} parent=62 // pred_check_branch
                %739 = sbr.rel target = $region89
              $region88: #{tpu_custom_call.1} parent=62 // pred_region
                _
              $region89: #{tpu_custom_call.1} parent=62 // pred_fallthru
                _
            $region63: #{tpu_custom_call.1} parent=58 // pred_fallthru
              _
            // Predicated region
            $region64: #{tpu_custom_call.1} parent=58 // pred_check
              _
            $region65: #{tpu_custom_call.1} parent=58 // pred_check_branch
              %590 = sbr.rel target = $region67
            $region66: #{tpu_custom_call.1} parent=58 // pred_region
              loop: start=0, step=1, limit=1
              $region68: #{tpu_custom_call.1} parent=66 // loop_pre_header
                _
              $region69: #{tpu_custom_call.1} parent=66 // loop_header
                %s593 = sphi 0, %s597
                %p594 = scmp.ge.s32.totalorder %s593, 1
                %s598 = sphi %s571, %s571
                %s599 = sphi %s584, %s584
              $region70: #{tpu_custom_call.1} parent=66 // loop_header_branch
                %596 = sbr.rel (%p594) target = $region74
              $region71: #{tpu_custom_call.1} parent=66 // loop_body
                %v600 = vld [vmem:[%s598] sm:$0xff]
                %601 = vst [vmem:[%s599] sm:$0xff] %v600
                %v602 = vld [vmem:[%s598 + $0x8] sm:$0xff]
                %603 = vst [vmem:[%s599 + $0x8] sm:$0xff] %v602
                %v604 = vld [vmem:[%s598 + $0x10] sm:$0xff]
                %605 = vst [vmem:[%s599 + $0x10] sm:$0xff] %v604
                %v606 = vld [vmem:[%s598 + $0x18] sm:$0xff]
                %607 = vst [vmem:[%s599 + $0x18] sm:$0xff] %v606
                %v608 = vld [vmem:[%s598 + $0x20] sm:$0xff]
                %609 = vst [vmem:[%s599 + $0x20] sm:$0xff] %v608
                %v610 = vld [vmem:[%s598 + $0x28] sm:$0xff]
                %611 = vst [vmem:[%s599 + $0x28] sm:$0xff] %v610
                %v612 = vld [vmem:[%s598 + $0x30] sm:$0xff]
                %613 = vst [vmem:[%s599 + $0x30] sm:$0xff] %v612
                %v614 = vld [vmem:[%s598 + $0x38] sm:$0xff]
                %615 = vst [vmem:[%s599 + $0x38] sm:$0xff] %v614
                %v616 = vld [vmem:[%s598 + $0x40] sm:$0xff]
                %617 = vst [vmem:[%s599 + $0x40] sm:$0xff] %v616
                %v618 = vld [vmem:[%s598 + $0x48] sm:$0xff]
                %619 = vst [vmem:[%s599 + $0x48] sm:$0xff] %v618
                %v620 = vld [vmem:[%s598 + $0x50] sm:$0xff]
                %621 = vst [vmem:[%s599 + $0x50] sm:$0xff] %v620
                %v622 = vld [vmem:[%s598 + $0x58] sm:$0xff]
                %623 = vst [vmem:[%s599 + $0x58] sm:$0xff] %v622
                %v624 = vld [vmem:[%s598 + $0x60] sm:$0xff]
                %625 = vst [vmem:[%s599 + $0x60] sm:$0xff] %v624
                %v626 = vld [vmem:[%s598 + $0x68] sm:$0xff]
                %627 = vst [vmem:[%s599 + $0x68] sm:$0xff] %v626
                %v628 = vld [vmem:[%s598 + $0x70] sm:$0xff]
                %629 = vst [vmem:[%s599 + $0x70] sm:$0xff] %v628
                %v630 = vld [vmem:[%s598 + $0x78] sm:$0xff]
                %631 = vst [vmem:[%s599 + $0x78] sm:$0xff] %v630
                %v632 = vld [vmem:[%s598 + $0x80] sm:$0xff]
                %633 = vst [vmem:[%s599 + $0x100] sm:$0xff] %v632
                %v634 = vld [vmem:[%s598 + $0x88] sm:$0xff]
                %635 = vst [vmem:[%s599 + $0x108] sm:$0xff] %v634
                %v636 = vld [vmem:[%s598 + $0x90] sm:$0xff]
                %637 = vst [vmem:[%s599 + $0x110] sm:$0xff] %v636
                %v638 = vld [vmem:[%s598 + $0x98] sm:$0xff]
                %639 = vst [vmem:[%s599 + $0x118] sm:$0xff] %v638
                %v640 = vld [vmem:[%s598 + $0xa0] sm:$0xff]
                %641 = vst [vmem:[%s599 + $0x120] sm:$0xff] %v640
                %v642 = vld [vmem:[%s598 + $0xa8] sm:$0xff]
                %643 = vst [vmem:[%s599 + $0x128] sm:$0xff] %v642
                %v644 = vld [vmem:[%s598 + $0xb0] sm:$0xff]
                %645 = vst [vmem:[%s599 + $0x130] sm:$0xff] %v644
                %v646 = vld [vmem:[%s598 + $0xb8] sm:$0xff]
                %647 = vst [vmem:[%s599 + $0x138] sm:$0xff] %v646
                %v648 = vld [vmem:[%s598 + $0xc0] sm:$0xff]
                %649 = vst [vmem:[%s599 + $0x140] sm:$0xff] %v648
                %v650 = vld [vmem:[%s598 + $0xc8] sm:$0xff]
                %651 = vst [vmem:[%s599 + $0x148] sm:$0xff] %v650
                %v652 = vld [vmem:[%s598 + $0xd0] sm:$0xff]
                %653 = vst [vmem:[%s599 + $0x150] sm:$0xff] %v652
                %v654 = vld [vmem:[%s598 + $0xd8] sm:$0xff]
                %655 = vst [vmem:[%s599 + $0x158] sm:$0xff] %v654
                %v656 = vld [vmem:[%s598 + $0xe0] sm:$0xff]
                %657 = vst [vmem:[%s599 + $0x160] sm:$0xff] %v656
                %v658 = vld [vmem:[%s598 + $0xe8] sm:$0xff]
                %659 = vst [vmem:[%s599 + $0x168] sm:$0xff] %v658
                %v660 = vld [vmem:[%s598 + $0xf0] sm:$0xff]
                %661 = vst [vmem:[%s599 + $0x170] sm:$0xff] %v660
                %v662 = vld [vmem:[%s598 + $0xf8] sm:$0xff]
                %663 = vst [vmem:[%s599 + $0x178] sm:$0xff] %v662
              $region72: #{tpu_custom_call.1} parent=66 // loop_footer
                %s597 = sadd.s32 1, %s593
              $region73: #{tpu_custom_call.1} parent=66 // loop_footer_branch
                %592 = sbr.rel target = $region69
              $region74: #{tpu_custom_call.1} parent=66 // loop_exit
                _
            $region67: #{tpu_custom_call.1} parent=58 // pred_fallthru
              _
          $region59: #{tpu_custom_call.1} parent=54 // pred_fallthru
            _
          %740 = vnop
        $region55: #{tpu_custom_call.1} parent=31 // pred_fallthru
          _
        // Predicated region
        $region90: #{tpu_custom_call.1} parent=31 // pred_check
          %p741 = pneg %p161
        $region91: #{tpu_custom_call.1} parent=31 // pred_check_branch
          %743 = sbr.rel (%p741) target = $region93
        $region92: #{tpu_custom_call.1} parent=31 // pred_region
          %s744 = smul.u32 2, %s26
          %s745 = smul.u32 16, %s27
          %s746 = smul.addr %s744, 32
          %s747 = sadd.s32 %s745, %s746
          %s748 = smul.addr %s747, 8
          %s749 = scalar_lea.vmem %s4, %s748
          // Predicated region
          $region94: #{tpu_custom_call.1} parent=92 // pred_check
            _
          $region95: #{tpu_custom_call.1} parent=92 // pred_check_branch
            %751 = sbr.rel (0) target = $region97
          $region96: #{tpu_custom_call.1} parent=92 // pred_region
            // Predicated region
            $region98: #{tpu_custom_call.1} parent=96 // pred_check
              _
            $region99: #{tpu_custom_call.1} parent=96 // pred_check_branch
              %753 = sbr.rel (0) target = $region101
            $region100: #{tpu_custom_call.1} parent=96 // pred_region
              // Predicated region
              $region113: #{tpu_custom_call.1} parent=100 // pred_check
                _
              $region114: #{tpu_custom_call.1} parent=100 // pred_check_branch
                %830 = sbr.rel (0) target = $region116
              $region115: #{tpu_custom_call.1} parent=100 // pred_region
                loop: start=0, step=1, limit=1
                $region117: #{tpu_custom_call.1} parent=115 // loop_pre_header
                  _
                $region118: #{tpu_custom_call.1} parent=115 // loop_header
                  %s832 = sphi 0, %s836
                  %p833 = scmp.ge.s32.totalorder %s832, 1
                  %s837 = sphi %s575, %s575
                  %s838 = sphi %s749, %s749
                $region119: #{tpu_custom_call.1} parent=115 // loop_header_branch
                  %835 = sbr.rel (%p833) target = $region123
                $region120: #{tpu_custom_call.1} parent=115 // loop_body
                  %v839 = vld [vmem:[%s837] sm:$0xff]
                  %840 = vst [vmem:[%s838] sm:$0xff] %v839
                  %v841 = vld [vmem:[%s837 + $0x8] sm:$0xff]
                  %842 = vst [vmem:[%s838 + $0x8] sm:$0xff] %v841
                  %v843 = vld [vmem:[%s837 + $0x10] sm:$0xff]
                  %844 = vst [vmem:[%s838 + $0x10] sm:$0xff] %v843
                  %v845 = vld [vmem:[%s837 + $0x18] sm:$0xff]
                  %846 = vst [vmem:[%s838 + $0x18] sm:$0xff] %v845
                  %v847 = vld [vmem:[%s837 + $0x20] sm:$0xff]
                  %848 = vst [vmem:[%s838 + $0x20] sm:$0xff] %v847
                  %v849 = vld [vmem:[%s837 + $0x28] sm:$0xff]
                  %850 = vst [vmem:[%s838 + $0x28] sm:$0xff] %v849
                  %v851 = vld [vmem:[%s837 + $0x30] sm:$0xff]
                  %852 = vst [vmem:[%s838 + $0x30] sm:$0xff] %v851
                  %v853 = vld [vmem:[%s837 + $0x38] sm:$0xff]
                  %854 = vst [vmem:[%s838 + $0x38] sm:$0xff] %v853
                  %v855 = vld [vmem:[%s837 + $0x40] sm:$0xff]
                  %856 = vst [vmem:[%s838 + $0x40] sm:$0xff] %v855
                  %v857 = vld [vmem:[%s837 + $0x48] sm:$0xff]
                  %858 = vst [vmem:[%s838 + $0x48] sm:$0xff] %v857
                  %v859 = vld [vmem:[%s837 + $0x50] sm:$0xff]
                  %860 = vst [vmem:[%s838 + $0x50] sm:$0xff] %v859
                  %v861 = vld [vmem:[%s837 + $0x58] sm:$0xff]
                  %862 = vst [vmem:[%s838 + $0x58] sm:$0xff] %v861
                  %v863 = vld [vmem:[%s837 + $0x60] sm:$0xff]
                  %864 = vst [vmem:[%s838 + $0x60] sm:$0xff] %v863
                  %v865 = vld [vmem:[%s837 + $0x68] sm:$0xff]
                  %866 = vst [vmem:[%s838 + $0x68] sm:$0xff] %v865
                  %v867 = vld [vmem:[%s837 + $0x70] sm:$0xff]
                  %868 = vst [vmem:[%s838 + $0x70] sm:$0xff] %v867
                  %v869 = vld [vmem:[%s837 + $0x78] sm:$0xff]
                  %870 = vst [vmem:[%s838 + $0x78] sm:$0xff] %v869
                  %v871 = vld [vmem:[%s837 + $0x80] sm:$0xff]
                  %872 = vst [vmem:[%s838 + $0x100] sm:$0xff] %v871
                  %v873 = vld [vmem:[%s837 + $0x88] sm:$0xff]
                  %874 = vst [vmem:[%s838 + $0x108] sm:$0xff] %v873
                  %v875 = vld [vmem:[%s837 + $0x90] sm:$0xff]
                  %876 = vst [vmem:[%s838 + $0x110] sm:$0xff] %v875
                  %v877 = vld [vmem:[%s837 + $0x98] sm:$0xff]
                  %878 = vst [vmem:[%s838 + $0x118] sm:$0xff] %v877
                  %v879 = vld [vmem:[%s837 + $0xa0] sm:$0xff]
                  %880 = vst [vmem:[%s838 + $0x120] sm:$0xff] %v879
                  %v881 = vld [vmem:[%s837 + $0xa8] sm:$0xff]
                  %882 = vst [vmem:[%s838 + $0x128] sm:$0xff] %v881
                  %v883 = vld [vmem:[%s837 + $0xb0] sm:$0xff]
                  %884 = vst [vmem:[%s838 + $0x130] sm:$0xff] %v883
                  %v885 = vld [vmem:[%s837 + $0xb8] sm:$0xff]
                  %886 = vst [vmem:[%s838 + $0x138] sm:$0xff] %v885
                  %v887 = vld [vmem:[%s837 + $0xc0] sm:$0xff]
                  %888 = vst [vmem:[%s838 + $0x140] sm:$0xff] %v887
                  %v889 = vld [vmem:[%s837 + $0xc8] sm:$0xff]
                  %890 = vst [vmem:[%s838 + $0x148] sm:$0xff] %v889
                  %v891 = vld [vmem:[%s837 + $0xd0] sm:$0xff]
                  %892 = vst [vmem:[%s838 + $0x150] sm:$0xff] %v891
                  %v893 = vld [vmem:[%s837 + $0xd8] sm:$0xff]
                  %894 = vst [vmem:[%s838 + $0x158] sm:$0xff] %v893
                  %v895 = vld [vmem:[%s837 + $0xe0] sm:$0xff]
                  %896 = vst [vmem:[%s838 + $0x160] sm:$0xff] %v895
                  %v897 = vld [vmem:[%s837 + $0xe8] sm:$0xff]
                  %898 = vst [vmem:[%s838 + $0x168] sm:$0xff] %v897
                  %v899 = vld [vmem:[%s837 + $0xf0] sm:$0xff]
                  %900 = vst [vmem:[%s838 + $0x170] sm:$0xff] %v899
                  %v901 = vld [vmem:[%s837 + $0xf8] sm:$0xff]
                  %902 = vst [vmem:[%s838 + $0x178] sm:$0xff] %v901
                $region121: #{tpu_custom_call.1} parent=115 // loop_footer
                  %s836 = sadd.s32 1, %s832
                $region122: #{tpu_custom_call.1} parent=115 // loop_footer_branch
                  %831 = sbr.rel target = $region118
                $region123: #{tpu_custom_call.1} parent=115 // loop_exit
                  _
              $region116: #{tpu_custom_call.1} parent=100 // pred_fallthru
                _
              // Predicated region
              $region124: #{tpu_custom_call.1} parent=100 // pred_check
                _
              $region125: #{tpu_custom_call.1} parent=100 // pred_check_branch
                %904 = sbr.rel target = $region127
              $region126: #{tpu_custom_call.1} parent=100 // pred_region
                _
              $region127: #{tpu_custom_call.1} parent=100 // pred_fallthru
                _
            $region101: #{tpu_custom_call.1} parent=96 // pred_fallthru
              _
            // Predicated region
            $region102: #{tpu_custom_call.1} parent=96 // pred_check
              _
            $region103: #{tpu_custom_call.1} parent=96 // pred_check_branch
              %755 = sbr.rel target = $region105
            $region104: #{tpu_custom_call.1} parent=96 // pred_region
              loop: start=0, step=1, limit=1
              $region106: #{tpu_custom_call.1} parent=104 // loop_pre_header
                _
              $region107: #{tpu_custom_call.1} parent=104 // loop_header
                %s758 = sphi 0, %s762
                %p759 = scmp.ge.s32.totalorder %s758, 1
                %s763 = sphi %s575, %s575
                %s764 = sphi %s749, %s749
              $region108: #{tpu_custom_call.1} parent=104 // loop_header_branch
                %761 = sbr.rel (%p759) target = $region112
              $region109: #{tpu_custom_call.1} parent=104 // loop_body
                %v765 = vld [vmem:[%s763] sm:$0xff]
                %766 = vst [vmem:[%s764] sm:$0xff] %v765
                %v767 = vld [vmem:[%s763 + $0x8] sm:$0xff]
                %768 = vst [vmem:[%s764 + $0x8] sm:$0xff] %v767
                %v769 = vld [vmem:[%s763 + $0x10] sm:$0xff]
                %770 = vst [vmem:[%s764 + $0x10] sm:$0xff] %v769
                %v771 = vld [vmem:[%s763 + $0x18] sm:$0xff]
                %772 = vst [vmem:[%s764 + $0x18] sm:$0xff] %v771
                %v773 = vld [vmem:[%s763 + $0x20] sm:$0xff]
                %774 = vst [vmem:[%s764 + $0x20] sm:$0xff] %v773
                %v775 = vld [vmem:[%s763 + $0x28] sm:$0xff]
                %776 = vst [vmem:[%s764 + $0x28] sm:$0xff] %v775
                %v777 = vld [vmem:[%s763 + $0x30] sm:$0xff]
                %778 = vst [vmem:[%s764 + $0x30] sm:$0xff] %v777
                %v779 = vld [vmem:[%s763 + $0x38] sm:$0xff]
                %780 = vst [vmem:[%s764 + $0x38] sm:$0xff] %v779
                %v781 = vld [vmem:[%s763 + $0x40] sm:$0xff]
                %782 = vst [vmem:[%s764 + $0x40] sm:$0xff] %v781
                %v783 = vld [vmem:[%s763 + $0x48] sm:$0xff]
                %784 = vst [vmem:[%s764 + $0x48] sm:$0xff] %v783
                %v785 = vld [vmem:[%s763 + $0x50] sm:$0xff]
                %786 = vst [vmem:[%s764 + $0x50] sm:$0xff] %v785
                %v787 = vld [vmem:[%s763 + $0x58] sm:$0xff]
                %788 = vst [vmem:[%s764 + $0x58] sm:$0xff] %v787
                %v789 = vld [vmem:[%s763 + $0x60] sm:$0xff]
                %790 = vst [vmem:[%s764 + $0x60] sm:$0xff] %v789
                %v791 = vld [vmem:[%s763 + $0x68] sm:$0xff]
                %792 = vst [vmem:[%s764 + $0x68] sm:$0xff] %v791
                %v793 = vld [vmem:[%s763 + $0x70] sm:$0xff]
                %794 = vst [vmem:[%s764 + $0x70] sm:$0xff] %v793
                %v795 = vld [vmem:[%s763 + $0x78] sm:$0xff]
                %796 = vst [vmem:[%s764 + $0x78] sm:$0xff] %v795
                %v797 = vld [vmem:[%s763 + $0x80] sm:$0xff]
                %798 = vst [vmem:[%s764 + $0x100] sm:$0xff] %v797
                %v799 = vld [vmem:[%s763 + $0x88] sm:$0xff]
                %800 = vst [vmem:[%s764 + $0x108] sm:$0xff] %v799
                %v801 = vld [vmem:[%s763 + $0x90] sm:$0xff]
                %802 = vst [vmem:[%s764 + $0x110] sm:$0xff] %v801
                %v803 = vld [vmem:[%s763 + $0x98] sm:$0xff]
                %804 = vst [vmem:[%s764 + $0x118] sm:$0xff] %v803
                %v805 = vld [vmem:[%s763 + $0xa0] sm:$0xff]
                %806 = vst [vmem:[%s764 + $0x120] sm:$0xff] %v805
                %v807 = vld [vmem:[%s763 + $0xa8] sm:$0xff]
                %808 = vst [vmem:[%s764 + $0x128] sm:$0xff] %v807
                %v809 = vld [vmem:[%s763 + $0xb0] sm:$0xff]
                %810 = vst [vmem:[%s764 + $0x130] sm:$0xff] %v809
                %v811 = vld [vmem:[%s763 + $0xb8] sm:$0xff]
                %812 = vst [vmem:[%s764 + $0x138] sm:$0xff] %v811
                %v813 = vld [vmem:[%s763 + $0xc0] sm:$0xff]
                %814 = vst [vmem:[%s764 + $0x140] sm:$0xff] %v813
                %v815 = vld [vmem:[%s763 + $0xc8] sm:$0xff]
                %816 = vst [vmem:[%s764 + $0x148] sm:$0xff] %v815
                %v817 = vld [vmem:[%s763 + $0xd0] sm:$0xff]
                %818 = vst [vmem:[%s764 + $0x150] sm:$0xff] %v817
                %v819 = vld [vmem:[%s763 + $0xd8] sm:$0xff]
                %820 = vst [vmem:[%s764 + $0x158] sm:$0xff] %v819
                %v821 = vld [vmem:[%s763 + $0xe0] sm:$0xff]
                %822 = vst [vmem:[%s764 + $0x160] sm:$0xff] %v821
                %v823 = vld [vmem:[%s763 + $0xe8] sm:$0xff]
                %824 = vst [vmem:[%s764 + $0x168] sm:$0xff] %v823
                %v825 = vld [vmem:[%s763 + $0xf0] sm:$0xff]
                %826 = vst [vmem:[%s764 + $0x170] sm:$0xff] %v825
                %v827 = vld [vmem:[%s763 + $0xf8] sm:$0xff]
                %828 = vst [vmem:[%s764 + $0x178] sm:$0xff] %v827
              $region110: #{tpu_custom_call.1} parent=104 // loop_footer
                %s762 = sadd.s32 1, %s758
              $region111: #{tpu_custom_call.1} parent=104 // loop_footer_branch
                %757 = sbr.rel target = $region107
              $region112: #{tpu_custom_call.1} parent=104 // loop_exit
                _
            $region105: #{tpu_custom_call.1} parent=96 // pred_fallthru
              _
          $region97: #{tpu_custom_call.1} parent=92 // pred_fallthru
            _
          %905 = vnop
        $region93: #{tpu_custom_call.1} parent=31 // pred_fallthru
          _
      $region32: #{tpu_custom_call.1} parent=5 // pred_fallthru
        _
      %p906 = scmp.le.s32.totalorder 2, %s17
      // Predicated region
      $region128: #{tpu_custom_call.1} parent=5 // pred_check
        %p907 = pneg %p906
      $region129: #{tpu_custom_call.1} parent=5 // pred_check_branch
        %909 = sbr.rel (%p907) target = $region131
      $region130: #{tpu_custom_call.1} parent=5 // pred_region
        %s910 = ssub.s32 %s17, 2
        // Predicated region
        $region132: #{tpu_custom_call.1} parent=130 // pred_check
          %p911 = pneg %p139
        $region133: #{tpu_custom_call.1} parent=130 // pred_check_branch
          %913 = sbr.rel (%p911) target = $region135
        $region134: #{tpu_custom_call.1} parent=130 // pred_region
          %s914 = sand.u32 %s124, 1
          %s915 = sand.u32 %s124, 1
          %s916 = smul.addr %s915, 256
          %s917 = scalar_lea.vmem [#allocation7], %s916
        $region135: #{tpu_custom_call.1} parent=130 // pred_fallthru
          _
        // Predicated region
        $region136: #{tpu_custom_call.1} parent=130 // pred_check
          %p918 = pneg %p167
        $region137: #{tpu_custom_call.1} parent=130 // pred_check_branch
          %920 = sbr.rel (%p918) target = $region139
        $region138: #{tpu_custom_call.1} parent=130 // pred_region
          %s921 = sand.u32 %s152, 1
          %s922 = sand.u32 %s152, 1
          %s923 = smul.addr %s922, 256
          %s924 = scalar_lea.vmem [#allocation8], %s923
        $region139: #{tpu_custom_call.1} parent=130 // pred_fallthru
          _
      $region131: #{tpu_custom_call.1} parent=5 // pred_fallthru
        _
    $region6: #{tpu_custom_call.1} parent=1 // loop_footer
      %s21 = sadd.s32 1, %s17
    $region7: #{tpu_custom_call.1} parent=1 // loop_footer_branch
      %16 = sbr.rel target = $region3
    $region8: #{tpu_custom_call.1} parent=1 // loop_exit
      _
    %925 = vsyncpa [#allocation3], 1
    %s926 = scalar_lea.sflag [#allocation3], 1
    %927 = vsyncpa %s926, 1
    %928 = vsyncpa [#allocation5], 1
    %s929 = scalar_lea.sflag [#allocation5], 1
    %930 = vsyncpa %s929, 1

</llo_original>
